<compile_context>
chip_gen: v5e
topology: v5e:2x2
jax: 0.10.0
libtpu: 0.0.40
codegen_flags: <defaults>
</compile_context>

<pallas_src>
import numpy as np
import jax
import jax.numpy as jnp
from jax.experimental import pallas as pl
from jax.experimental.pallas import tpu as pltpu


# ----------------------------------------------------------------------------
# Pallas kernel: one lane-dense TILE-wide output-column tile per grid step,
# batch fused into the sublane (row) dimension.
# ----------------------------------------------------------------------------
def _down_kernel(xt_ref, hcat_ref, h0t_ref, op_ref,
                 wr_ref, shr_ref, w3_ref, sh3_ref, o_ref):
    f32 = jnp.float32

    # ---- MeshConv: single wide MXU matmul, coefficients pre-applied to the LHS ----
    #   mesh = (c1'h)@L^T + (c2'h)@G_EW + (c3'h)@G_NS  for this column tile
    mesh = jnp.dot(hcat_ref[...], op_ref[0], preferred_element_type=f32)   # (B*Cin, TILE)

    # identity-coefficient term + bn2 shift (precomputed per tile, f32) + ReLU
    h2 = jnp.maximum(mesh + h0t_ref[...], 0.0)

    # ---- conv3 (1x1, bn3 scale folded) + residual branch (Wr, bnr scale folded) ----
    y1 = jnp.dot(w3_ref[...], h2.astype(jnp.bfloat16),
                 preferred_element_type=f32) + sh3_ref[...]
    y2 = jnp.dot(wr_ref[...], xt_ref[...],
                 preferred_element_type=f32) + shr_ref[...]

    o_ref[...] = jnp.maximum(y1 + y2, 0.0)


# ----------------------------------------------------------------------------
# Wrapper
# ----------------------------------------------------------------------------
def down_forward(x, kp):
    B, cin, _ = x.shape
    nv_c, ncp = kp["nv_c"], kp["ncp"]
    TILE, n_tiles = kp["TILE"], kp["n_tiles"]
    cout = kp["W3bd"].shape[0] // B
    padc = ncp - nv_c

    # DownSamp commuted ahead of the pointwise 1x1 convs: only the first nv_c
    # vertices of the fine mesh are ever used.
    xs = x[:, :, :nv_c]                                           # (B, Cin, nv_c)

    # ---- grid-invariant stage 1 hoisted out of the kernel: conv1 + bn1 + ReLU ----
    h = jnp.maximum(jnp.einsum("oi,biv->bov", kp["W1s"], xs) + kp["sh1"], 0.0)

    # Pre-apply bn2-scaled coefficients c1/c2/c3 to the LHS; column blocks match the
    # vertically stacked [L^T; G_EW; G_NS] operator.
    ck = jnp.einsum("koi,biv->kbov", kp["C123"], h)               # (3, B, Cin, nv_c)
    ck = jnp.pad(ck, ((0, 0), (0, 0), (0, 0), (0, padc)))         # padded cols are ZERO
    hcat = jnp.concatenate(
        [ck[0].reshape(B * cin, ncp),
         ck[1].reshape(B * cin, ncp),
         ck[2].reshape(B * cin, ncp)], axis=1).astype(jnp.bfloat16)   # (B*Cin, 3*ncp)

    # Identity-coefficient term + bn2 shift, kept in f32 (exact).
    h0 = jnp.einsum("oi,biv->bov", kp["C0"], h) + kp["sh2"]
    h0 = jnp.pad(h0, ((0, 0), (0, 0), (0, padc))).reshape(B * cin, ncp)

    # Residual-branch input, lane-padded, bf16 MXU operand.
    xp = jnp.pad(xs, ((0, 0), (0, 0), (0, padc))).reshape(B * cin, ncp)
    xp = xp.astype(jnp.bfloat16)

    const = lambda a: pl.BlockSpec(a.shape, lambda j: (0, 0))

    in_specs = [
        pl.BlockSpec((B * cin, TILE), lambda j: (0, j)),          # x column tile (residual)
        const(hcat),                                              # coefficient-weighted h (LHS)
        pl.BlockSpec((B * cin, TILE), lambda j: (0, j)),          # c0 term + bn2 shift tile
        pl.BlockSpec((1, 3 * ncp, TILE), lambda j: (j, 0, 0)),    # fused operator, tile-major
        const(kp["Wrbd"]), const(kp["shr"]),
        const(kp["W3bd"]), const(kp["sh3"]),
    ]

    # VMEM budget (double-buffered); raise the scoped limit only when it matters.
    op_tile_bytes = 3 * ncp * TILE * 2
    stream_bytes = B * cin * TILE * (2 + 4) + B * cout * TILE * 4
    const_bytes = B * cin * 3 * ncp * 2 + 2 * (B * cout) * (B * cin) * 2 + 2 * (B * cout) * 4
    vmem_est = 2 * (op_tile_bytes + stream_bytes + const_bytes) + 2 * 2 ** 20
    vmem_limit = int(min(2 * vmem_est, 56 * 2 ** 20)) if vmem_est > 12 * 2 ** 20 else None

    out = pl.pallas_call(
        _down_kernel,
        out_shape=jax.ShapeDtypeStruct((B * cout, ncp), jnp.float32),
        grid_spec=pltpu.PrefetchScalarGridSpec(
            num_scalar_prefetch=0,
            grid=(n_tiles,),
            in_specs=in_specs,
            out_specs=pl.BlockSpec((B * cout, TILE), lambda j: (0, j)),
        ),
        compiler_params=pltpu.CompilerParams(
            dimension_semantics=("parallel",),
            vmem_limit_bytes=vmem_limit),
    )(xp, hcat, h0, kp["OPv"], kp["Wrbd"], kp["shr"], kp["W3bd"], kp["sh3"])

    return out.reshape(B, cout, ncp)[:, :, :nv_c]


# ----------------------------------------------------------------------------
# Parameter preparation (plain-JAX glue): exact algebraic fusions for the kernel.
# ----------------------------------------------------------------------------
def prepare_kernel_params(p, B):
    nv_c = p["L"].shape[0]
    # TILE=256 fills the 256-wide v6e/v7x MXU column dim and amortizes grid overhead;
    # fall back to 128 when 256 would leave < 2 column tiles (keeps both v7x TCs busy).
    TILE = 256 if nv_c > 256 else 128
    ncp = ((nv_c + TILE - 1) // TILE) * TILE
    n_tiles = ncp // TILE

    def bdiag_bf16(w):                 # kron(I_B, w): block-diagonal over batch (small B)
        return jnp.kron(jnp.eye(B, dtype=w.dtype), w).astype(jnp.bfloat16)

    def tile_shift(s):                 # (C,1) per-channel shift -> (B*C,1)
        return jnp.tile(s, (B, 1))

    # Pre-fuse gradient pipeline (grad -> EW/NS projection -> face-to-vertex) into two
    # dense (nv_c, nv_c) operators applied as  h @ op.
    A_ew = sum(p["EW"][:, k:k + 1] * p["G"][k] for k in range(3))     # (F, Nc)
    A_ns = sum(p["NS"][:, k:k + 1] * p["G"][k] for k in range(3))
    GEW = (p["F2V"] @ A_ew).T                                         # (Nc, Nc)
    GNS = (p["F2V"] @ A_ns).T
    LT = p["L"].T

    def pad_op(m):                     # ZERO pad keeps lane padding inert (see header)
        return jnp.pad(m, ((0, ncp - nv_c), (0, ncp - nv_c)))

    # Vertically stack [L^T; G_EW; G_NS] (matching the [c1h | c2h | c3h] LHS blocks)
    # and re-lay out tile-major: (n_tiles, 3*ncp, TILE) so every grid step DMAs one
    # fully contiguous bf16 slab.
    OPv = jnp.concatenate([pad_op(LT), pad_op(GEW), pad_op(GNS)], axis=0)  # (3*ncp, ncp)
    OPv = OPv.reshape(3 * ncp, n_tiles, TILE).transpose(1, 0, 2).astype(jnp.bfloat16)

    # Fold BN scales into conv / coefficient weights; shifts stay per-channel adds.
    W1s = p["sc1"] * p["W1"]                       # stage-1 conv (applied in the wrapper)
    Csc = p["sc2"][None] * p["coeffs"]             # (4, Cin, Cin) bn2-scaled coefficients

    return {
        "nv_c": nv_c, "ncp": ncp, "TILE": TILE, "n_tiles": n_tiles,
        "W1s": W1s, "sh1": p["sh1"],
        "C0": Csc[0], "C123": Csc[1:], "sh2": p["sh2"],
        "W3bd": bdiag_bf16(p["sc3"] * p["W3"]), "sh3": tile_shift(p["sh3"]),
        "Wrbd": bdiag_bf16(p["scr"] * p["Wr"]), "shr": tile_shift(p["shr"]),
        "OPv": OPv,
    }


# ----------------------------------------------------------------------------
# Deterministic parameter / synthetic-mesh construction (glue, plain JAX)
# ----------------------------------------------------------------------------
def _bn_fold(gamma, beta, mean, var, conv_bias, eps=1e-5):
    scale = gamma / jnp.sqrt(var + eps)
    shift = beta - mean * scale + conv_bias * scale
    return scale[:, None].astype(jnp.float32), shift[:, None].astype(jnp.float32)


def init_params(key, in_ch, out_ch, level):
    nv_c = 10 * 4 ** level + 2     # vertices of coarse icosphere (nv_prev)
    n_f = 20 * 4 ** level          # faces of coarse icosphere
    ks = list(jax.random.split(key, 32))

    def rnd(shape, scale=0.1):
        return scale * jax.random.normal(ks.pop(), shape, jnp.float32)

    # --- 1x1 Conv1d weights / biases ---
    W1, b1 = rnd((in_ch, in_ch)), rnd((in_ch,))
    W3, b3 = rnd((out_ch, in_ch)), rnd((out_ch,))
    Wr, br = rnd((out_ch, in_ch)), rnd((out_ch,))

    # --- MeshConv parameters ---
    coeffs_t = rnd((in_ch, in_ch, 4))          # torch layout: (out, in, ncoeff=4)
    mesh_bias = rnd((in_ch,))

    # --- synthetic mesh operators (dense stand-ins for the pickle'd sparse ops) ---
    G = rnd((3, n_f, nv_c), 0.05)              # gradient:  V -> 3 components per face
    L = rnd((nv_c, nv_c), 0.05)                # laplacian: V -> V
    F2V = rnd((nv_c, n_f), 0.05)               # face -> vertex averaging
    EW = rnd((n_f, 3), 1.0)
    NS = rnd((n_f, 3), 1.0)
    EW = EW / jnp.linalg.norm(EW, axis=-1, keepdims=True)   # unit tangent fields
    NS = NS / jnp.linalg.norm(NS, axis=-1, keepdims=True)

    # --- BatchNorm (eval mode) params, folded with the preceding bias ---
    def bn(c):
        g = 1.0 + rnd((c,), 0.1)
        b = rnd((c,), 0.1)
        m = rnd((c,), 0.1)
        v = 0.5 + jnp.abs(rnd((c,), 0.2))
        return g, b, m, v

    sc1, sh1 = _bn_fold(*bn(in_ch), conv_bias=b1)
    sc2, sh2 = _bn_fold(*bn(in_ch), conv_bias=mesh_bias)
    sc3, sh3 = _bn_fold(*bn(out_ch), conv_bias=b3)
    scr, shr = _bn_fold(*bn(out_ch), conv_bias=br)

    return {
        "W1": W1, "sc1": sc1, "sh1": sh1,
        "W3": W3, "sc3": sc3, "sh3": sh3,
        "Wr": Wr, "scr": scr, "shr": shr,
        "coeffs": jnp.transpose(coeffs_t, (2, 0, 1)),   # (4, Cin, Cin)
        "sc2": sc2, "sh2": sh2,
        "L": L, "G": G, "F2V": F2V, "EW": EW, "NS": NS,
    }


# ----------------------------------------------------------------------------
# Pure-numpy reference (mirrors the torch forward math, with the same BN fold)
# ----------------------------------------------------------------------------
def ref_forward_np(x, p):
    g = {k: np.asarray(v, np.float64) for k, v in p.items()}
    x = np.asarray(x, np.float64)
    nv_c = g["L"].shape[0]
    outs = []
    for b in range(x.shape[0]):
        xb = x[b]
        h = (g["W1"] @ xb)[:, :nv_c]
        h = np.maximum(h * g["sc1"] + g["sh1"], 0.0)
        lap = h @ g["L"].T
        gf = [h @ g["G"][k].T for k in range(3)]
        gf_ew = sum(gf[k] * g["EW"][:, k] for k in range(3))
        gf_ns = sum(gf[k] * g["NS"][:, k] for k in range(3))
        gv_ew = gf_ew @ g["F2V"].T
        gv_ns = gf_ns @ g["F2V"].T
        mc = (g["coeffs"][0] @ h + g["coeffs"][1] @ lap +
              g["coeffs"][2] @ gv_ew + g["coeffs"][3] @ gv_ns)
        h2 = np.maximum(mc * g["sc2"] + g["sh2"], 0.0)
        y1 = (g["W3"] @ h2) * g["sc3"] + g["sh3"]
        y2 = (g["Wr"] @ xb)[:, :nv_c] * g["scr"] + g["shr"]
        outs.append(np.maximum(y1 + y2, 0.0))
    return np.stack(outs)


# ----------------------------------------------------------------------------
if __name__ == "__main__":
    key = jax.random.PRNGKey(0)
    B, in_ch, out_ch, level = 2, 4, 8, 2          # Down(in_ch=4, out_ch=8, level=2)
    nv_in = 10 * 4 ** (level + 1) + 2             # 642 vertices (fine mesh, level+1)

    k_x, k_p = jax.random.split(key)
    x = jax.random.normal(k_x, (B, in_ch, nv_in), jnp.float32)
    params = init_params(k_p, in_ch, out_ch, level)
    kparams = prepare_kernel_params(params, B)

    fwd = jax.jit(lambda xx: down_forward(xx, kparams))
    out = jax.block_until_ready(fwd(x))

    nv_c = 10 * 4 ** level + 2                    # 162 vertices (coarse mesh)
    assert out.shape == (B, out_ch, nv_c), out.shape
    assert np.all(np.isfinite(np.asarray(out)))

    ref = ref_forward_np(x, params)
    np.testing.assert_allclose(np.asarray(out), ref, rtol=5e-2, atol=2e-2)

    print("KERNEL_OK")
</pallas_src>

<mosaic_0001>
module attributes {stable_mosaic.version = 11 : i64} {
  func.func @_down_kernel(%arg0: i32, %arg1: memref<8x128xbf16, #tpu.memory_space<vmem>>, %arg2: memref<8x768xbf16, #tpu.memory_space<vmem>>, %arg3: memref<8x128xf32, #tpu.memory_space<vmem>>, %arg4: memref<1x768x128xbf16, #tpu.memory_space<vmem>>, %arg5: memref<16x8xbf16, #tpu.memory_space<vmem>>, %arg6: memref<16x1xf32, #tpu.memory_space<vmem>>, %arg7: memref<16x8xbf16, #tpu.memory_space<vmem>>, %arg8: memref<16x1xf32, #tpu.memory_space<vmem>>, %arg9: memref<16x128xf32, #tpu.memory_space<vmem>>) attributes {dimension_semantics = [#tpu.dimension_semantics<parallel>], iteration_bounds = array<i64: 2>, scalar_prefetch = 0 : i64, scratch_operands = 0 : i64, tpu.core_type = #tpu.core_type<tc>, window_params = [{transform_indices = @transform_0, window_bounds = array<i64: 8, 128>}, {pipeline_mode = #tpu.pipeline_mode<synchronous>, transform_indices = @transform_1, window_bounds = array<i64: 8, 768>}, {transform_indices = @transform_2, window_bounds = array<i64: 8, 128>}, {transform_indices = @transform_3, window_bounds = array<i64: 1, 768, 128>}, {pipeline_mode = #tpu.pipeline_mode<synchronous>, transform_indices = @transform_4, window_bounds = array<i64: 16, 8>}, {pipeline_mode = #tpu.pipeline_mode<synchronous>, transform_indices = @transform_5, window_bounds = array<i64: 16, 1>}, {pipeline_mode = #tpu.pipeline_mode<synchronous>, transform_indices = @transform_6, window_bounds = array<i64: 16, 8>}, {pipeline_mode = #tpu.pipeline_mode<synchronous>, transform_indices = @transform_7, window_bounds = array<i64: 16, 1>}, {transform_indices = @transform_8, window_bounds = array<i64: 16, 128>}]} {
    %c0 = arith.constant 0 : index
    %c0_0 = arith.constant 0 : index
    %0 = vector.load %arg2[%c0, %c0_0] : memref<8x768xbf16, #tpu.memory_space<vmem>>, vector<8x768xbf16>
    %c0_1 = arith.constant 0 : index
    %c0_2 = arith.constant 0 : index
    %c0_3 = arith.constant 0 : index
    %1 = vector.load %arg4[%c0_1, %c0_2, %c0_3] : memref<1x768x128xbf16, #tpu.memory_space<vmem>>, vector<1x768x128xbf16>
    %2 = vector.shape_cast %1 : vector<1x768x128xbf16> to vector<768x128xbf16>
    %cst = arith.constant dense<0.000000e+00> : vector<8x128xf32>
    %3 = tpu.matmul %0, %2, %cst {dimension_numbers = #tpu.dot_dimension_numbers<[1], [0], [0], [1], [0, 0, 1, 1], [], []>} : vector<8x768xbf16>, vector<768x128xbf16>, vector<8x128xf32> -> vector<8x128xf32>
    %c0_4 = arith.constant 0 : index
    %c0_5 = arith.constant 0 : index
    %4 = vector.load %arg3[%c0_4, %c0_5] : memref<8x128xf32, #tpu.memory_space<vmem>>, vector<8x128xf32>
    %5 = arith.addf %3, %4 : vector<8x128xf32>
    %cst_6 = arith.constant 0.000000e+00 : f32
    %6 = vector.broadcast %cst_6 : f32 to vector<8x128xf32>
    %7 = arith.maximumf %5, %6 : vector<8x128xf32>
    %c0_7 = arith.constant 0 : index
    %c0_8 = arith.constant 0 : index
    %8 = vector.load %arg7[%c0_7, %c0_8] : memref<16x8xbf16, #tpu.memory_space<vmem>>, vector<16x8xbf16>
    %9 = arith.truncf %7 : vector<8x128xf32> to vector<8x128xbf16>
    %cst_9 = arith.constant dense<0.000000e+00> : vector<16x128xf32>
    %10 = tpu.matmul %8, %9, %cst_9 {dimension_numbers = #tpu.dot_dimension_numbers<[1], [0], [0], [1], [0, 0, 1, 1], [], []>} : vector<16x8xbf16>, vector<8x128xbf16>, vector<16x128xf32> -> vector<16x128xf32>
    %c0_10 = arith.constant 0 : index
    %c0_11 = arith.constant 0 : index
    %11 = vector.load %arg8[%c0_10, %c0_11] : memref<16x1xf32, #tpu.memory_space<vmem>>, vector<16x1xf32>
    %12 = vector.broadcast %11 : vector<16x1xf32> to vector<16x128xf32>
    %13 = arith.addf %10, %12 : vector<16x128xf32>
    %c0_12 = arith.constant 0 : index
    %c0_13 = arith.constant 0 : index
    %14 = vector.load %arg5[%c0_12, %c0_13] : memref<16x8xbf16, #tpu.memory_space<vmem>>, vector<16x8xbf16>
    %c0_14 = arith.constant 0 : index
    %c0_15 = arith.constant 0 : index
    %15 = vector.load %arg1[%c0_14, %c0_15] : memref<8x128xbf16, #tpu.memory_space<vmem>>, vector<8x128xbf16>
    %cst_16 = arith.constant dense<0.000000e+00> : vector<16x128xf32>
    %16 = tpu.matmul %14, %15, %cst_16 {dimension_numbers = #tpu.dot_dimension_numbers<[1], [0], [0], [1], [0, 0, 1, 1], [], []>} : vector<16x8xbf16>, vector<8x128xbf16>, vector<16x128xf32> -> vector<16x128xf32>
    %c0_17 = arith.constant 0 : index
    %c0_18 = arith.constant 0 : index
    %17 = vector.load %arg6[%c0_17, %c0_18] : memref<16x1xf32, #tpu.memory_space<vmem>>, vector<16x1xf32>
    %18 = vector.broadcast %17 : vector<16x1xf32> to vector<16x128xf32>
    %19 = arith.addf %16, %18 : vector<16x128xf32>
    %20 = arith.addf %13, %19 : vector<16x128xf32>
    %cst_19 = arith.constant 0.000000e+00 : f32
    %21 = vector.broadcast %cst_19 : f32 to vector<16x128xf32>
    %22 = arith.maximumf %20, %21 : vector<16x128xf32>
    %c0_20 = arith.constant 0 : index
    %c0_21 = arith.constant 0 : index
    %23 = vector.load %arg9[%c0_20, %c0_21] : memref<16x128xf32, #tpu.memory_space<vmem>>, vector<16x128xf32>
    tpu.vector_store %arg9[%c0_20, %c0_21], %22 {strides = array<i32>} : memref<16x128xf32, #tpu.memory_space<vmem>>, vector<16x128xf32>,
    return
  }
  func.func @transform_0(%arg0: i32) -> (i32, i32) {
    %c0_i32 = arith.constant 0 : i32
    %c0_i32_0 = arith.constant 0 : i32
    return %c0_i32, %arg0 : i32, i32
  }
  func.func @transform_1(%arg0: i32) -> (i32, i32) {
    %c0_i32 = arith.constant 0 : i32
    %c0_i32_0 = arith.constant 0 : i32
    %c0_i32_1 = arith.constant 0 : i32
    return %c0_i32, %c0_i32_0 : i32, i32
  }
  func.func @transform_2(%arg0: i32) -> (i32, i32) {
    %c0_i32 = arith.constant 0 : i32
    %c0_i32_0 = arith.constant 0 : i32
    return %c0_i32, %arg0 : i32, i32
  }
  func.func @transform_3(%arg0: i32) -> (i32, i32, i32) {
    %c0_i32 = arith.constant 0 : i32
    %c0_i32_0 = arith.constant 0 : i32
    %c0_i32_1 = arith.constant 0 : i32
    return %arg0, %c0_i32, %c0_i32_0 : i32, i32, i32
  }
  func.func @transform_4(%arg0: i32) -> (i32, i32) {
    %c0_i32 = arith.constant 0 : i32
    %c0_i32_0 = arith.constant 0 : i32
    %c0_i32_1 = arith.constant 0 : i32
    return %c0_i32, %c0_i32_0 : i32, i32
  }
  func.func @transform_5(%arg0: i32) -> (i32, i32) {
    %c0_i32 = arith.constant 0 : i32
    %c0_i32_0 = arith.constant 0 : i32
    %c0_i32_1 = arith.constant 0 : i32
    return %c0_i32, %c0_i32_0 : i32, i32
  }
  func.func @transform_6(%arg0: i32) -> (i32, i32) {
    %c0_i32 = arith.constant 0 : i32
    %c0_i32_0 = arith.constant 0 : i32
    %c0_i32_1 = arith.constant 0 : i32
    return %c0_i32, %c0_i32_0 : i32, i32
  }
  func.func @transform_7(%arg0: i32) -> (i32, i32) {
    %c0_i32 = arith.constant 0 : i32
    %c0_i32_0 = arith.constant 0 : i32
    %c0_i32_1 = arith.constant 0 : i32
    return %c0_i32, %c0_i32_0 : i32, i32
  }
  func.func @transform_8(%arg0: i32) -> (i32, i32) {
    %c0_i32 = arith.constant 0 : i32
    %c0_i32_0 = arith.constant 0 : i32
    return %c0_i32, %arg0 : i32, i32
  }
}

</mosaic_0001>

<llo_original>
// kernel: squeeze.2
$region0: #{squeeze.2}
  %s0 = inlined_call_operand.vmem [shape: bf16[1,2,4,256], index: 0, kind: input, shape index: {}]
  %s1 = inlined_call_operand.vmem [shape: bf16[8,256], index: 1, kind: output, shape index: {}]
  $region1: #{squeeze.2} parent=0
    #allocation0 [shape = 'u8[8192]{0}', space=vmem, size = 0x2000, scoped, tag = 'scoped mem for output reshape']
    #allocation1 [shape = 'u8[16384]{0}', space=vmem, size = 0x4000, scoped, tag = 'scoped mem for input reshape']
    %s3 = ssub.s32 16, 1
    %s4 = scalar_lea.vmem %s0, 6
    %s5 = sshrl.u32 %s3, 1
    %s6 = sor.u32 %s3, %s5
    %s7 = sand.u32 %s6, 85
    %s8 = sshrl.u32 %s7, 1
    %s9 = sor.u32 %s7, %s8
    %s10 = sand.u32 51, %s9
    %s11 = sshrl.u32 %s10, 2
    %s12 = sor.u32 %s10, %s11
    %s13 = sand.u32 15, %s12
    %v14 = vld [vmem:[%s4] sm:%s13]
    %v15 = vunpack.c.l.bf16 %v14
    %v16 = vunpack.c.h.bf16 %v14
    %s17 = scalar_lea.vmem [#allocation1], 24
    %18 = vst [vmem:[%s17] sm:%s3] %v15
    %s19 = scalar_lea.vmem %s0, 4
    %s20 = sshrl.u32 %s3, 1
    %s21 = sor.u32 %s3, %s20
    %s22 = sand.u32 %s21, 85
    %s23 = sshrl.u32 %s22, 1
    %s24 = sor.u32 %s22, %s23
    %s25 = sand.u32 51, %s24
    %s26 = sshrl.u32 %s25, 2
    %s27 = sor.u32 %s25, %s26
    %s28 = sand.u32 15, %s27
    %v29 = vld [vmem:[%s19] sm:%s28]
    %v30 = vunpack.c.l.bf16 %v29
    %v31 = vunpack.c.h.bf16 %v29
    %s32 = scalar_lea.vmem [#allocation1], 16
    %33 = vst [vmem:[%s32] sm:%s3] %v30
    %s34 = scalar_lea.vmem %s0, 2
    %s35 = sshrl.u32 %s3, 1
    %s36 = sor.u32 %s3, %s35
    %s37 = sand.u32 %s36, 85
    %s38 = sshrl.u32 %s37, 1
    %s39 = sor.u32 %s37, %s38
    %s40 = sand.u32 51, %s39
    %s41 = sshrl.u32 %s40, 2
    %s42 = sor.u32 %s40, %s41
    %s43 = sand.u32 15, %s42
    %v44 = vld [vmem:[%s34] sm:%s43]
    %v45 = vunpack.c.l.bf16 %v44
    %v46 = vunpack.c.h.bf16 %v44
    %s47 = scalar_lea.vmem [#allocation1], 8
    %48 = vst [vmem:[%s47] sm:%s3] %v45
    %s49 = sshrl.u32 %s3, 1
    %s50 = sor.u32 %s3, %s49
    %s51 = sand.u32 %s50, 85
    %s52 = sshrl.u32 %s51, 1
    %s53 = sor.u32 %s51, %s52
    %s54 = sand.u32 51, %s53
    %s55 = sshrl.u32 %s54, 2
    %s56 = sor.u32 %s54, %s55
    %s57 = sand.u32 15, %s56
    %v58 = vld [vmem:[%s0] sm:%s57]
    %v59 = vunpack.c.l.bf16 %v58
    %v60 = vunpack.c.h.bf16 %v58
    %61 = vst [vmem:[#allocation1] sm:%s3] %v59
    %v62 = vld [vmem:[#allocation1] sm:$0xf]
    %63 = vst [vmem:[#allocation0] sm:$0xf] %v62
    %s64 = scalar_lea.vmem [#allocation1], 8
    %v65 = vld [vmem:[%s64] sm:$0xf]
    %s66 = scalar_lea.vmem [#allocation0], 8
    %67 = vst [vmem:[%s66] sm:$0xf] %v65
    %s68 = scalar_lea.vmem [#allocation1], 16
    %v69 = vld [vmem:[%s68] sm:$0xf]
    %s70 = scalar_lea.vmem [#allocation0], 4
    %71 = vst [vmem:[%s70] sm:$0xf] %v69
    %s72 = scalar_lea.vmem [#allocation1], 24
    %v73 = vld [vmem:[%s72] sm:$0xf]
    %s74 = scalar_lea.vmem [#allocation0], 12
    %75 = vst [vmem:[%s74] sm:$0xf] %v73
    %s77 = ssub.s32 256, 1
    %v78 = vld [vmem:[#allocation0] sm:%s77]
    %v79 = vpack.c.bf16 0.0, %v78
    %s81 = ssub.s32 16, 1
    %82 = vst [vmem:[%s1] sm:%s81] %v79
    %s83 = scalar_lea.vmem [#allocation0], 8
    %v84 = vld [vmem:[%s83] sm:%s77]
    %v85 = vpack.c.bf16 0.0, %v84
    %s87 = ssub.s32 16, 1
    %s88 = scalar_lea.vmem %s1, 4
    %89 = vst [vmem:[%s88] sm:%s87] %v85

// kernel: _lambda_.1
$region0: #{_lambda_.1}
  #allocation0 [shape = 'u32[]', space=smem, size = 0x4, offset = 0x4, fixed_abs, tag = 'smem constant byte address 0x4 - core index']
  #allocation1 [shape = 'u32[72,128]{1,0:T(1,128)}', space=vmem, size = 0x9000, scoped, tag = 'internal scratch']
  %s0 = inlined_call_operand.vmem [shape: bf16[8,256], index: 0, kind: input, shape index: {}]
  %s1 = inlined_call_operand.vmem [shape: bf16[8,768], index: 1, kind: input, shape index: {}]
  %s2 = inlined_call_operand.vmem [shape: f32[8,256], index: 2, kind: input, shape index: {}]
  %s3 = inlined_call_operand.hbm [shape: bf16[2,768,128], index: 3, kind: input, shape index: {}]
  %s4 = inlined_call_operand.vmem [shape: bf16[16,8], index: 4, kind: input, shape index: {}]
  %s5 = inlined_call_operand.vmem [shape: f32[16,1], index: 5, kind: input, shape index: {}]
  %s6 = inlined_call_operand.vmem [shape: bf16[16,8], index: 6, kind: input, shape index: {}]
  %s7 = inlined_call_operand.vmem [shape: f32[16,1], index: 7, kind: input, shape index: {}]
  %s8 = inlined_call_operand.hbm [shape: f32[16,256], index: 8, kind: output, shape index: {}]
  %s9 = sld [smem:[#allocation0]]
  $region69: #{_lambda_.1} parent=0
    _
  %s11 = ssub.s32 1, %s9
  %s12 = scalar_select 0, %s11, %s9
  $region1: #{_lambda_.1} parent=0
    #allocation2 [shape = 'u8[393216]{0}', space=vmem, size = 0x60000, scoped, tag = 'input window, operand 3']
    #allocation3 [shape = 's32[2]{0}', space=sflag, size = 0x8, scoped, tag = 'scoped memory for _lambda_.1']
    #allocation4 [shape = 's32[2]{0}', space=sflag, size = 0x8, scoped, tag = 'scoped memory for _lambda_.1']
    #allocation5 [shape = 'u8[16384]{0}', space=vmem, size = 0x4000, scoped, tag = 'output window, operand 0']
    %13 = vsyncpa [#allocation3], 0
    %s14 = scalar_lea.sflag [#allocation3], 1
    %15 = vsyncpa %s14, 0
    %16 = vsyncpa [#allocation4], 0
    %s17 = scalar_lea.sflag [#allocation4], 1
    %18 = vsyncpa %s17, 0
    loop: start=0, step=1, limit=4
    $region2: #{_lambda_.1} parent=1 // loop_pre_header
      _
    $region3: #{_lambda_.1} parent=1 // loop_header
      %s20 = sphi 0, %s24
      %p21 = scmp.ge.s32.totalorder %s20, 4
      %s30 = sphi 0, %s32
      %s33 = sphi 0, %s30
      %s34 = sphi 0, %s33
      %s50 = sphi 0, %s34
      %s54 = sphi 0, %s54
      %s56 = sphi 0, %s54
      %s57 = sphi 0, %s56
      %s71 = sphi 0, %s57
      %s77 = sphi 0, %s79
      %s80 = sphi 0, %s77
      %s81 = sphi 0, %s80
      %s97 = sphi 0, %s81
      %s103 = sphi 0, %s105
      %s106 = sphi 0, %s103
      %s107 = sphi 0, %s106
      %s123 = sphi 0, %s107
      %s127 = sphi 0, %s127
      %s129 = sphi 0, %s127
      %s130 = sphi 0, %s129
      %s144 = sphi 0, %s130
      %s148 = sphi 0, %s148
      %s150 = sphi 0, %s148
      %s151 = sphi 0, %s150
      %s165 = sphi 0, %s151
      %s169 = sphi 0, %s169
      %s171 = sphi 0, %s169
      %s172 = sphi 0, %s171
      %s186 = sphi 0, %s172
      %s190 = sphi 0, %s190
      %s192 = sphi 0, %s190
      %s193 = sphi 0, %s192
      %s207 = sphi 0, %s193
      %s213 = sphi 0, %s215
      %s216 = sphi 0, %s213
      %s217 = sphi 0, %s216
      %s233 = sphi 0, %s217
    $region4: #{_lambda_.1} parent=1 // loop_header_branch
      %23 = sbr.rel (%p21) target = $region8
    $region5: #{_lambda_.1} parent=1 // loop_body
      %s25 = ssub.s32 %s20, 1
      %s26 = ssub.s32 %s20, 2
      %s27 = sadd.s32 %s20, 1
      %s28 = ssub.s32 %s20, %s27
      %p29 = scmp.eq.s32.totalorder %s28, 0
      %s31 = sadd.s32 %s30, 1
      %s32 = scalar_select %p29, %s30, %s31
      %p35 = pneg %p29
      %p36 = scmp.eq.s32.totalorder %s20, 1
      %p37 = por %p35, %p36
      %p38 = scmp.ne.s32.totalorder %s30, %s33
      %p39 = scmp.eq.s32.totalorder %s20, 0
      %p40 = por %p38, %p39
      %p41 = scmp.ne.s32.totalorder %s30, %s33
      %p42 = scmp.eq.s32.totalorder %s25, 1
      %p43 = por %p41, %p42
      %p44 = scmp.ne.s32.totalorder %s33, %s34
      %p45 = scmp.eq.s32.totalorder %s25, 0
      %p46 = por %p44, %p45
      %p47 = scmp.ne.s32.totalorder %s33, %s34
      %p48 = scmp.eq.s32.totalorder %s26, 1
      %p49 = por %p47, %p48
      %p51 = scmp.ne.s32.totalorder %s34, %s50
      %p52 = scmp.eq.s32.totalorder %s26, 0
      %p53 = por %p51, %p52
      %s55 = sadd.s32 %s54, 1
      %p58 = scmp.eq.s32.totalorder %s20, 1
      %p59 = scmp.ne.s32.totalorder %s54, %s56
      %p60 = scmp.eq.s32.totalorder %s20, 0
      %p61 = por %p59, %p60
      %p62 = scmp.ne.s32.totalorder %s54, %s56
      %p63 = scmp.eq.s32.totalorder %s25, 1
      %p64 = por %p62, %p63
      %p65 = scmp.ne.s32.totalorder %s56, %s57
      %p66 = scmp.eq.s32.totalorder %s25, 0
      %p67 = por %p65, %p66
      %p68 = scmp.ne.s32.totalorder %s56, %s57
      %p69 = scmp.eq.s32.totalorder %s26, 1
      %p70 = por %p68, %p69
      %p72 = scmp.ne.s32.totalorder %s57, %s71
      %p73 = scmp.eq.s32.totalorder %s26, 0
      %p74 = por %p72, %p73
      %s75 = ssub.s32 %s20, %s27
      %p76 = scmp.eq.s32.totalorder %s75, 0
      %s78 = sadd.s32 %s77, 1
      %s79 = scalar_select %p76, %s77, %s78
      %p82 = pneg %p76
      %p83 = scmp.eq.s32.totalorder %s20, 1
      %p84 = por %p82, %p83
      %p85 = scmp.ne.s32.totalorder %s77, %s80
      %p86 = scmp.eq.s32.totalorder %s20, 0
      %p87 = por %p85, %p86
      %p88 = scmp.ne.s32.totalorder %s77, %s80
      %p89 = scmp.eq.s32.totalorder %s25, 1
      %p90 = por %p88, %p89
      %p91 = scmp.ne.s32.totalorder %s80, %s81
      %p92 = scmp.eq.s32.totalorder %s25, 0
      %p93 = por %p91, %p92
      %p94 = scmp.ne.s32.totalorder %s80, %s81
      %p95 = scmp.eq.s32.totalorder %s26, 1
      %p96 = por %p94, %p95
      %p98 = scmp.ne.s32.totalorder %s81, %s97
      %p99 = scmp.eq.s32.totalorder %s26, 0
      %p100 = por %p98, %p99
      %s101 = ssub.s32 %s20, %s27
      %p102 = scmp.eq.s32.totalorder %s101, 0
      %s104 = sadd.s32 %s103, 1
      %s105 = scalar_select %p102, %s103, %s104
      %p108 = pneg %p102
      %p109 = scmp.eq.s32.totalorder %s20, 1
      %p110 = por %p108, %p109
      %p111 = scmp.ne.s32.totalorder %s103, %s106
      %p112 = scmp.eq.s32.totalorder %s20, 0
      %p113 = por %p111, %p112
      %p114 = scmp.ne.s32.totalorder %s103, %s106
      %p115 = scmp.eq.s32.totalorder %s25, 1
      %p116 = por %p114, %p115
      %p117 = scmp.ne.s32.totalorder %s106, %s107
      %p118 = scmp.eq.s32.totalorder %s25, 0
      %p119 = por %p117, %p118
      %p120 = scmp.ne.s32.totalorder %s106, %s107
      %p121 = scmp.eq.s32.totalorder %s26, 1
      %p122 = por %p120, %p121
      %p124 = scmp.ne.s32.totalorder %s107, %s123
      %p125 = scmp.eq.s32.totalorder %s26, 0
      %p126 = por %p124, %p125
      %s128 = sadd.s32 %s127, 1
      %p131 = scmp.eq.s32.totalorder %s20, 1
      %p132 = scmp.ne.s32.totalorder %s127, %s129
      %p133 = scmp.eq.s32.totalorder %s20, 0
      %p134 = por %p132, %p133
      %p135 = scmp.ne.s32.totalorder %s127, %s129
      %p136 = scmp.eq.s32.totalorder %s25, 1
      %p137 = por %p135, %p136
      %p138 = scmp.ne.s32.totalorder %s129, %s130
      %p139 = scmp.eq.s32.totalorder %s25, 0
      %p140 = por %p138, %p139
      %p141 = scmp.ne.s32.totalorder %s129, %s130
      %p142 = scmp.eq.s32.totalorder %s26, 1
      %p143 = por %p141, %p142
      %p145 = scmp.ne.s32.totalorder %s130, %s144
      %p146 = scmp.eq.s32.totalorder %s26, 0
      %p147 = por %p145, %p146
      %s149 = sadd.s32 %s148, 1
      %p152 = scmp.eq.s32.totalorder %s20, 1
      %p153 = scmp.ne.s32.totalorder %s148, %s150
      %p154 = scmp.eq.s32.totalorder %s20, 0
      %p155 = por %p153, %p154
      %p156 = scmp.ne.s32.totalorder %s148, %s150
      %p157 = scmp.eq.s32.totalorder %s25, 1
      %p158 = por %p156, %p157
      %p159 = scmp.ne.s32.totalorder %s150, %s151
      %p160 = scmp.eq.s32.totalorder %s25, 0
      %p161 = por %p159, %p160
      %p162 = scmp.ne.s32.totalorder %s150, %s151
      %p163 = scmp.eq.s32.totalorder %s26, 1
      %p164 = por %p162, %p163
      %p166 = scmp.ne.s32.totalorder %s151, %s165
      %p167 = scmp.eq.s32.totalorder %s26, 0
      %p168 = por %p166, %p167
      %s170 = sadd.s32 %s169, 1
      %p173 = scmp.eq.s32.totalorder %s20, 1
      %p174 = scmp.ne.s32.totalorder %s169, %s171
      %p175 = scmp.eq.s32.totalorder %s20, 0
      %p176 = por %p174, %p175
      %p177 = scmp.ne.s32.totalorder %s169, %s171
      %p178 = scmp.eq.s32.totalorder %s25, 1
      %p179 = por %p177, %p178
      %p180 = scmp.ne.s32.totalorder %s171, %s172
      %p181 = scmp.eq.s32.totalorder %s25, 0
      %p182 = por %p180, %p181
      %p183 = scmp.ne.s32.totalorder %s171, %s172
      %p184 = scmp.eq.s32.totalorder %s26, 1
      %p185 = por %p183, %p184
      %p187 = scmp.ne.s32.totalorder %s172, %s186
      %p188 = scmp.eq.s32.totalorder %s26, 0
      %p189 = por %p187, %p188
      %s191 = sadd.s32 %s190, 1
      %p194 = scmp.eq.s32.totalorder %s20, 1
      %p195 = scmp.ne.s32.totalorder %s190, %s192
      %p196 = scmp.eq.s32.totalorder %s20, 0
      %p197 = por %p195, %p196
      %p198 = scmp.ne.s32.totalorder %s190, %s192
      %p199 = scmp.eq.s32.totalorder %s25, 1
      %p200 = por %p198, %p199
      %p201 = scmp.ne.s32.totalorder %s192, %s193
      %p202 = scmp.eq.s32.totalorder %s25, 0
      %p203 = por %p201, %p202
      %p204 = scmp.ne.s32.totalorder %s192, %s193
      %p205 = scmp.eq.s32.totalorder %s26, 1
      %p206 = por %p204, %p205
      %p208 = scmp.ne.s32.totalorder %s193, %s207
      %p209 = scmp.eq.s32.totalorder %s26, 0
      %p210 = por %p208, %p209
      %s211 = ssub.s32 %s20, %s27
      %p212 = scmp.eq.s32.totalorder %s211, 0
      %s214 = sadd.s32 %s213, 1
      %s215 = scalar_select %p212, %s213, %s214
      %p218 = pneg %p212
      %p219 = scmp.eq.s32.totalorder %s20, 1
      %p220 = por %p218, %p219
      %p221 = scmp.ne.s32.totalorder %s213, %s216
      %p222 = scmp.eq.s32.totalorder %s20, 0
      %p223 = por %p221, %p222
      %p224 = scmp.ne.s32.totalorder %s213, %s216
      %p225 = scmp.eq.s32.totalorder %s25, 1
      %p226 = por %p224, %p225
      %p227 = scmp.ne.s32.totalorder %s216, %s217
      %p228 = scmp.eq.s32.totalorder %s25, 0
      %p229 = por %p227, %p228
      %p230 = scmp.ne.s32.totalorder %s216, %s217
      %p231 = scmp.eq.s32.totalorder %s26, 1
      %p232 = por %p230, %p231
      %p234 = scmp.ne.s32.totalorder %s217, %s233
      %p235 = scmp.eq.s32.totalorder %s26, 0
      %p236 = por %p234, %p235
      %p237 = scmp.le.s32.totalorder 1, %s20
      %p238 = scmp.lt.s32.totalorder %s20, 3
      %p239 = pnand %p237, %p238
      %p240 = pneg %p239
      // Predicated region
      $region9: #{_lambda_.1} parent=5 // pred_check
        _
      $region10: #{_lambda_.1} parent=5 // pred_check_branch
        %242 = sbr.rel (%p239) target = $region12
      $region11: #{_lambda_.1} parent=5 // pred_region
        %s243 = ssub.s32 %s20, 1
        // Predicated region
        $region13: #{_lambda_.1} parent=11 // pred_check
          %p244 = pneg %p67
        $region14: #{_lambda_.1} parent=11 // pred_check_branch
          %246 = sbr.rel (%p244) target = $region16
        $region15: #{_lambda_.1} parent=11 // pred_region
          _
        $region16: #{_lambda_.1} parent=11 // pred_fallthru
          _
        // Predicated region
        $region17: #{_lambda_.1} parent=11 // pred_check
          %p247 = pneg %p140
        $region18: #{_lambda_.1} parent=11 // pred_check_branch
          %249 = sbr.rel (%p247) target = $region20
        $region19: #{_lambda_.1} parent=11 // pred_region
          _
        $region20: #{_lambda_.1} parent=11 // pred_fallthru
          _
        // Predicated region
        $region21: #{_lambda_.1} parent=11 // pred_check
          %p250 = pneg %p161
        $region22: #{_lambda_.1} parent=11 // pred_check_branch
          %252 = sbr.rel (%p250) target = $region24
        $region23: #{_lambda_.1} parent=11 // pred_region
          _
        $region24: #{_lambda_.1} parent=11 // pred_fallthru
          _
        // Predicated region
        $region25: #{_lambda_.1} parent=11 // pred_check
          %p253 = pneg %p182
        $region26: #{_lambda_.1} parent=11 // pred_check_branch
          %255 = sbr.rel (%p253) target = $region28
        $region27: #{_lambda_.1} parent=11 // pred_region
          _
        $region28: #{_lambda_.1} parent=11 // pred_fallthru
          _
        // Predicated region
        $region29: #{_lambda_.1} parent=11 // pred_check
          %p256 = pneg %p203
        $region30: #{_lambda_.1} parent=11 // pred_check_branch
          %258 = sbr.rel (%p256) target = $region32
        $region31: #{_lambda_.1} parent=11 // pred_region
          _
        $region32: #{_lambda_.1} parent=11 // pred_fallthru
          _
      $region12: #{_lambda_.1} parent=5 // pred_fallthru
        _
      %p259 = scmp.lt.s32.totalorder %s20, 2
      // Predicated region
      $region33: #{_lambda_.1} parent=5 // pred_check
        %p260 = pneg %p259
      $region34: #{_lambda_.1} parent=5 // pred_check_branch
        %262 = sbr.rel (%p260) target = $region36
      $region35: #{_lambda_.1} parent=5 // pred_region
        // Predicated region
        $region37: #{_lambda_.1} parent=35 // pred_check
          %p263 = pneg %p40
        $region38: #{_lambda_.1} parent=35 // pred_check_branch
          %265 = sbr.rel (%p263) target = $region40
        $region39: #{_lambda_.1} parent=35 // pred_region
          %p266 = scmp.lt.s32.totalorder %s20, 1
          %s267 = scalar_select %p266, %s20, 1
          %s268 = smul.addr %s267, 4
          %s269 = scalar_lea.vmem %s0, %s268
        $region40: #{_lambda_.1} parent=35 // pred_fallthru
          _
        // Predicated region
        $region41: #{_lambda_.1} parent=35 // pred_check
          %p270 = pneg %p87
        $region42: #{_lambda_.1} parent=35 // pred_check_branch
          %272 = sbr.rel (%p270) target = $region44
        $region43: #{_lambda_.1} parent=35 // pred_region
          %p273 = scmp.lt.s32.totalorder %s20, 1
          %s274 = scalar_select %p273, %s20, 1
          %s275 = smul.addr %s274, 8
          %s276 = scalar_lea.vmem %s2, %s275
        $region44: #{_lambda_.1} parent=35 // pred_fallthru
          _
        // Predicated region
        $region45: #{_lambda_.1} parent=35 // pred_check
          %p277 = pneg %p113
        $region46: #{_lambda_.1} parent=35 // pred_check_branch
          %279 = sbr.rel (%p277) target = $region48
        $region47: #{_lambda_.1} parent=35 // pred_region
          %s280 = sand.u32 %s103, 1
          %s281 = scalar_lea.sflag [#allocation3], %s280
          %s282 = sand.u32 %s103, 1
          %s283 = smul.addr %s282, 384
          %s284 = scalar_lea.vmem [#allocation2], %s283
          %286 = vsyncadd %s281, 0
          %s287 = smul.addr %s20, 96
          %s288 = smul.addr %s287, 4
          %s289 = scalar_lea.hbm %s3, %s288
          %s290 = sshll.u32 %s289, 4
          %s291 = int_to_ptr.hbm [resolvable:$true] %s290
          %s292 = sshll.u32 %s284, 4
          %s293 = int_to_ptr.vmem [resolvable:$true] %s292
          %298 = dma.hbm_to_vmem [thread:$0]  %s291, 6144, %s293, %s281, 64, 64, 4
        $region48: #{_lambda_.1} parent=35 // pred_fallthru
          _
      $region36: #{_lambda_.1} parent=5 // pred_fallthru
        _
      %p299 = scmp.le.s32.totalorder 1, %s20
      %p300 = scmp.lt.s32.totalorder %s20, 3
      %p301 = pnand %p299, %p300
      %p302 = pneg %p301
      // Predicated region
      $region49: #{_lambda_.1} parent=5 // pred_check
        _
      $region50: #{_lambda_.1} parent=5 // pred_check_branch
        %304 = sbr.rel (%p301) target = $region52
      $region51: #{_lambda_.1} parent=5 // pred_region
        %s305 = ssub.s32 %s20, 1
        %s306 = sand.u32 %s106, 1
        %s307 = scalar_lea.sflag [#allocation3], %s306
        %s308 = sand.u32 %s106, 1
        %s309 = smul.addr %s308, 384
        %s310 = scalar_lea.vmem [#allocation2], %s309
        // Predicated region
        $region53: #{_lambda_.1} parent=51 // pred_check
          %p311 = pneg %p119
        $region54: #{_lambda_.1} parent=51 // pred_check_branch
          %313 = sbr.rel (%p311) target = $region56
        $region55: #{_lambda_.1} parent=51 // pred_region
          %315 = dma.done %s307, 6144
        $region56: #{_lambda_.1} parent=51 // pred_fallthru
          _
        %p316 = scmp.lt.s32.totalorder %s25, 1
        %s317 = scalar_select %p316, %s25, 1
        %s318 = smul.addr %s317, 4
        %s319 = scalar_lea.vmem %s0, %s318
        %p320 = pneg %p46
        %p321 = pneg %p43
        %p322 = pneg %p67
        %p323 = pneg %p64
        %p324 = scmp.lt.s32.totalorder %s25, 1
        %s325 = scalar_select %p324, %s25, 1
        %s326 = smul.addr %s325, 8
        %s327 = scalar_lea.vmem %s2, %s326
        %p328 = pneg %p93
        %p329 = pneg %p90
        %s330 = sand.u32 %s106, 1
        %s331 = scalar_lea.sflag [#allocation3], %s330
        %s332 = sand.u32 %s106, 1
        %s333 = smul.addr %s332, 384
        %s334 = scalar_lea.vmem [#allocation2], %s333
        %p335 = pneg %p119
        %p336 = pneg %p116
        %p337 = pneg %p140
        %p338 = pneg %p137
        %p339 = pneg %p161
        %p340 = pneg %p158
        %p341 = pneg %p182
        %p342 = pneg %p179
        %p343 = pneg %p203
        %p344 = pneg %p200
        %p345 = pneg %p229
        %p346 = pneg %p226
        %s347 = sand.u32 %s216, 1
        %s348 = scalar_lea.sflag [#allocation4], %s347
        %s349 = sand.u32 %s216, 1
        %s350 = smul.addr %s349, 16
        %s351 = scalar_lea.vmem [#allocation5], %s350
        %p352 = scmp.lt.s32.totalorder %s25, 1
        %s353 = scalar_select %p352, %s25, 1
        %s354 = smul.addr %s353, 4
        %s355 = scalar_lea.vmem %s0, %s354
        %p356 = scmp.lt.s32.totalorder %s25, 1
        %s357 = scalar_select %p356, %s25, 1
        %s358 = smul.addr %s357, 8
        %s359 = scalar_lea.vmem %s2, %s358
        %v361 = vld [vmem:[%s1] sm:$0xff]
        %v362 = vld [vmem:[%s1 + $0x8] sm:$0xff]
        %v363 = vld [vmem:[%s1 + $0x10] sm:$0xff]
        %v364 = vld [vmem:[%s310] sm:$0xf]
        %v365 = vld [vmem:[%s310 + $0x4] sm:$0xf]
        %v366 = vld [vmem:[%s310 + $0x8] sm:$0xf]
        %v367 = vld [vmem:[%s310 + $0xc] sm:$0xf]
        %v368 = vld [vmem:[%s310 + $0x10] sm:$0xf]
        %v369 = vld [vmem:[%s310 + $0x14] sm:$0xf]
        %v370 = vld [vmem:[%s310 + $0x18] sm:$0xf]
        %v371 = vld [vmem:[%s310 + $0x1c] sm:$0xf]
        %v372 = vld [vmem:[%s310 + $0x20] sm:$0xf]
        %v373 = vld [vmem:[%s310 + $0x24] sm:$0xf]
        %v374 = vld [vmem:[%s310 + $0x28] sm:$0xf]
        %v375 = vld [vmem:[%s310 + $0x2c] sm:$0xf]
        %v376 = vld [vmem:[%s310 + $0x30] sm:$0xf]
        %v377 = vld [vmem:[%s310 + $0x34] sm:$0xf]
        %v378 = vld [vmem:[%s310 + $0x38] sm:$0xf]
        %v379 = vld [vmem:[%s310 + $0x3c] sm:$0xf]
        %v380 = vld [vmem:[%s310 + $0x40] sm:$0xf]
        %v381 = vld [vmem:[%s310 + $0x44] sm:$0xf]
        %v382 = vld [vmem:[%s310 + $0x48] sm:$0xf]
        %v383 = vld [vmem:[%s310 + $0x4c] sm:$0xf]
        %v384 = vld [vmem:[%s310 + $0x50] sm:$0xf]
        %v385 = vld [vmem:[%s310 + $0x54] sm:$0xf]
        %v386 = vld [vmem:[%s310 + $0x58] sm:$0xf]
        %v387 = vld [vmem:[%s310 + $0x5c] sm:$0xf]
        %v388 = vld [vmem:[%s310 + $0x60] sm:$0xf]
        %v389 = vld [vmem:[%s310 + $0x64] sm:$0xf]
        %v390 = vld [vmem:[%s310 + $0x68] sm:$0xf]
        %v391 = vld [vmem:[%s310 + $0x6c] sm:$0xf]
        %v392 = vld [vmem:[%s310 + $0x70] sm:$0xf]
        %v393 = vld [vmem:[%s310 + $0x74] sm:$0xf]
        %v394 = vld [vmem:[%s310 + $0x78] sm:$0xf]
        %v395 = vld [vmem:[%s310 + $0x7c] sm:$0xf]
        %v396 = vld [vmem:[%s310 + $0x80] sm:$0xf]
        %v397 = vld [vmem:[%s310 + $0x84] sm:$0xf]
        %v398 = vld [vmem:[%s310 + $0x88] sm:$0xf]
        %v399 = vld [vmem:[%s310 + $0x8c] sm:$0xf]
        %v400 = vld [vmem:[%s310 + $0x90] sm:$0xf]
        %v401 = vld [vmem:[%s310 + $0x94] sm:$0xf]
        %v402 = vld [vmem:[%s310 + $0x98] sm:$0xf]
        %v403 = vld [vmem:[%s310 + $0x9c] sm:$0xf]
        %v404 = vld [vmem:[%s310 + $0xa0] sm:$0xf]
        %v405 = vld [vmem:[%s310 + $0xa4] sm:$0xf]
        %v406 = vld [vmem:[%s310 + $0xa8] sm:$0xf]
        %v407 = vld [vmem:[%s310 + $0xac] sm:$0xf]
        %v408 = vld [vmem:[%s310 + $0xb0] sm:$0xf]
        %v409 = vld [vmem:[%s310 + $0xb4] sm:$0xf]
        %v410 = vld [vmem:[%s310 + $0xb8] sm:$0xf]
        %v411 = vld [vmem:[%s310 + $0xbc] sm:$0xf]
        %v412 = vld [vmem:[%s310 + $0xc0] sm:$0xf]
        %v413 = vld [vmem:[%s310 + $0xc4] sm:$0xf]
        %v414 = vld [vmem:[%s310 + $0xc8] sm:$0xf]
        %v415 = vld [vmem:[%s310 + $0xcc] sm:$0xf]
        %v416 = vld [vmem:[%s310 + $0xd0] sm:$0xf]
        %v417 = vld [vmem:[%s310 + $0xd4] sm:$0xf]
        %v418 = vld [vmem:[%s310 + $0xd8] sm:$0xf]
        %v419 = vld [vmem:[%s310 + $0xdc] sm:$0xf]
        %v420 = vld [vmem:[%s310 + $0xe0] sm:$0xf]
        %v421 = vld [vmem:[%s310 + $0xe4] sm:$0xf]
        %v422 = vld [vmem:[%s310 + $0xe8] sm:$0xf]
        %v423 = vld [vmem:[%s310 + $0xec] sm:$0xf]
        %v424 = vld [vmem:[%s310 + $0xf0] sm:$0xf]
        %v425 = vld [vmem:[%s310 + $0xf4] sm:$0xf]
        %v426 = vld [vmem:[%s310 + $0xf8] sm:$0xf]
        %v427 = vld [vmem:[%s310 + $0xfc] sm:$0xf]
        %v428 = vld [vmem:[%s310 + $0x100] sm:$0xf]
        %v429 = vld [vmem:[%s310 + $0x104] sm:$0xf]
        %v430 = vld [vmem:[%s310 + $0x108] sm:$0xf]
        %v431 = vld [vmem:[%s310 + $0x10c] sm:$0xf]
        %v432 = vld [vmem:[%s310 + $0x110] sm:$0xf]
        %v433 = vld [vmem:[%s310 + $0x114] sm:$0xf]
        %v434 = vld [vmem:[%s310 + $0x118] sm:$0xf]
        %v435 = vld [vmem:[%s310 + $0x11c] sm:$0xf]
        %v436 = vld [vmem:[%s310 + $0x120] sm:$0xf]
        %v437 = vld [vmem:[%s310 + $0x124] sm:$0xf]
        %v438 = vld [vmem:[%s310 + $0x128] sm:$0xf]
        %v439 = vld [vmem:[%s310 + $0x12c] sm:$0xf]
        %v440 = vld [vmem:[%s310 + $0x130] sm:$0xf]
        %v441 = vld [vmem:[%s310 + $0x134] sm:$0xf]
        %v442 = vld [vmem:[%s310 + $0x138] sm:$0xf]
        %v443 = vld [vmem:[%s310 + $0x13c] sm:$0xf]
        %v444 = vld [vmem:[%s310 + $0x140] sm:$0xf]
        %v445 = vld [vmem:[%s310 + $0x144] sm:$0xf]
        %v446 = vld [vmem:[%s310 + $0x148] sm:$0xf]
        %v447 = vld [vmem:[%s310 + $0x14c] sm:$0xf]
        %v448 = vld [vmem:[%s310 + $0x150] sm:$0xf]
        %v449 = vld [vmem:[%s310 + $0x154] sm:$0xf]
        %v450 = vld [vmem:[%s310 + $0x158] sm:$0xf]
        %v451 = vld [vmem:[%s310 + $0x15c] sm:$0xf]
        %v452 = vld [vmem:[%s310 + $0x160] sm:$0xf]
        %v453 = vld [vmem:[%s310 + $0x164] sm:$0xf]
        %v454 = vld [vmem:[%s310 + $0x168] sm:$0xf]
        %v455 = vld [vmem:[%s310 + $0x16c] sm:$0xf]
        %v456 = vld [vmem:[%s310 + $0x170] sm:$0xf]
        %v457 = vld [vmem:[%s310 + $0x174] sm:$0xf]
        %v458 = vld [vmem:[%s310 + $0x178] sm:$0xf]
        %v459 = vld [vmem:[%s310 + $0x17c] sm:$0xf]
        %v460 = vld [vmem:[%s359] sm:$0xff]
        %v464 = vunpack.c.l.b16 %v361
        %v465 = vunpack.c.h.b16 %v361
        %v466 = vunpack.c.l.b16 %v362
        %v467 = vunpack.c.h.b16 %v362
        %v468 = vunpack.c.l.b16 %v363
        %v469 = vunpack.c.h.b16 %v363
        %v470 = vpack.c.b16 %v464, %v464
        %v471 = vpack.c.b16 %v465, %v465
        %v472 = vpack.c.b16 %v466, %v466
        %v473 = vpack.c.b16 %v467, %v467
        %v474 = vpack.c.b16 %v468, %v468
        %v475 = vpack.c.b16 %v469, %v469
        %v578 = vunpack.c.l.b16 %v364
        %v579 = vunpack.c.l.b16 %v365
        %v580 = vunpack.c.l.b16 %v366
        %v581 = vunpack.c.l.b16 %v367
        %v582 = vunpack.c.l.b16 %v368
        %v583 = vunpack.c.l.b16 %v369
        %v584 = vunpack.c.l.b16 %v370
        %v585 = vunpack.c.l.b16 %v371
        %v586 = vunpack.c.l.b16 %v372
        %v587 = vunpack.c.l.b16 %v373
        %v588 = vunpack.c.l.b16 %v374
        %v589 = vunpack.c.l.b16 %v375
        %v590 = vunpack.c.l.b16 %v376
        %v591 = vunpack.c.l.b16 %v377
        %v592 = vunpack.c.l.b16 %v378
        %v593 = vunpack.c.l.b16 %v379
        %v594 = vunpack.c.l.b16 %v380
        %v595 = vunpack.c.l.b16 %v381
        %v596 = vunpack.c.l.b16 %v382
        %v597 = vunpack.c.l.b16 %v383
        %v598 = vunpack.c.l.b16 %v384
        %v599 = vunpack.c.l.b16 %v385
        %v600 = vunpack.c.l.b16 %v386
        %v601 = vunpack.c.l.b16 %v387
        %v602 = vunpack.c.l.b16 %v388
        %v603 = vunpack.c.l.b16 %v389
        %v604 = vunpack.c.l.b16 %v390
        %v605 = vunpack.c.l.b16 %v391
        %v606 = vunpack.c.l.b16 %v392
        %v607 = vunpack.c.l.b16 %v393
        %v608 = vunpack.c.l.b16 %v394
        %v609 = vunpack.c.l.b16 %v395
        %v610 = vunpack.c.l.b16 %v396
        %v611 = vunpack.c.l.b16 %v397
        %v612 = vunpack.c.l.b16 %v398
        %v613 = vunpack.c.l.b16 %v399
        %v614 = vunpack.c.l.b16 %v400
        %v615 = vunpack.c.l.b16 %v401
        %v616 = vunpack.c.l.b16 %v402
        %v617 = vunpack.c.l.b16 %v403
        %v618 = vunpack.c.l.b16 %v404
        %v619 = vunpack.c.l.b16 %v405
        %v620 = vunpack.c.l.b16 %v406
        %v621 = vunpack.c.l.b16 %v407
        %v622 = vunpack.c.l.b16 %v408
        %v623 = vunpack.c.l.b16 %v409
        %v624 = vunpack.c.l.b16 %v410
        %v625 = vunpack.c.l.b16 %v411
        %v626 = vunpack.c.l.b16 %v412
        %v627 = vunpack.c.l.b16 %v413
        %v628 = vunpack.c.l.b16 %v414
        %v629 = vunpack.c.l.b16 %v415
        %v630 = vunpack.c.l.b16 %v416
        %v631 = vunpack.c.l.b16 %v417
        %v632 = vunpack.c.l.b16 %v418
        %v633 = vunpack.c.l.b16 %v419
        %v634 = vunpack.c.l.b16 %v420
        %v635 = vunpack.c.l.b16 %v421
        %v636 = vunpack.c.l.b16 %v422
        %v637 = vunpack.c.l.b16 %v423
        %v638 = vunpack.c.l.b16 %v424
        %v639 = vunpack.c.l.b16 %v425
        %v640 = vunpack.c.l.b16 %v426
        %v641 = vunpack.c.l.b16 %v427
        %v642 = vunpack.c.l.b16 %v428
        %v643 = vunpack.c.l.b16 %v429
        %v644 = vunpack.c.l.b16 %v430
        %v645 = vunpack.c.l.b16 %v431
        %v646 = vunpack.c.l.b16 %v432
        %v647 = vunpack.c.l.b16 %v433
        %v648 = vunpack.c.l.b16 %v434
        %v649 = vunpack.c.l.b16 %v435
        %v650 = vunpack.c.l.b16 %v436
        %v651 = vunpack.c.l.b16 %v437
        %v652 = vunpack.c.l.b16 %v438
        %v653 = vunpack.c.l.b16 %v439
        %v654 = vunpack.c.l.b16 %v440
        %v655 = vunpack.c.l.b16 %v441
        %v656 = vunpack.c.l.b16 %v442
        %v657 = vunpack.c.l.b16 %v443
        %v658 = vunpack.c.l.b16 %v444
        %v659 = vunpack.c.l.b16 %v445
        %v660 = vunpack.c.l.b16 %v446
        %v661 = vunpack.c.l.b16 %v447
        %v662 = vunpack.c.l.b16 %v448
        %v663 = vunpack.c.l.b16 %v449
        %v664 = vunpack.c.l.b16 %v450
        %v665 = vunpack.c.l.b16 %v451
        %v666 = vunpack.c.l.b16 %v452
        %v667 = vunpack.c.l.b16 %v453
        %v668 = vunpack.c.l.b16 %v454
        %v669 = vunpack.c.l.b16 %v455
        %v670 = vunpack.c.l.b16 %v456
        %v671 = vunpack.c.l.b16 %v457
        %v672 = vunpack.c.l.b16 %v458
        %v673 = vunpack.c.l.b16 %v459
        %v674 = vpack.c.b16 %v579, %v578
        %v675 = vpack.c.b16 %v581, %v580
        %v676 = vpack.c.b16 %v583, %v582
        %v677 = vpack.c.b16 %v585, %v584
        %v678 = vpack.c.b16 %v587, %v586
        %v679 = vpack.c.b16 %v589, %v588
        %v680 = vpack.c.b16 %v591, %v590
        %v681 = vpack.c.b16 %v593, %v592
        %v682 = vpack.c.b16 %v595, %v594
        %v683 = vpack.c.b16 %v597, %v596
        %v684 = vpack.c.b16 %v599, %v598
        %v685 = vpack.c.b16 %v601, %v600
        %v686 = vpack.c.b16 %v603, %v602
        %v687 = vpack.c.b16 %v605, %v604
        %v688 = vpack.c.b16 %v607, %v606
        %v689 = vpack.c.b16 %v609, %v608
        %v690 = vpack.c.b16 %v611, %v610
        %v691 = vpack.c.b16 %v613, %v612
        %v692 = vpack.c.b16 %v615, %v614
        %v693 = vpack.c.b16 %v617, %v616
        %v694 = vpack.c.b16 %v619, %v618
        %v695 = vpack.c.b16 %v621, %v620
        %v696 = vpack.c.b16 %v623, %v622
        %v697 = vpack.c.b16 %v625, %v624
        %v698 = vpack.c.b16 %v627, %v626
        %v699 = vpack.c.b16 %v629, %v628
        %v700 = vpack.c.b16 %v631, %v630
        %v701 = vpack.c.b16 %v633, %v632
        %v702 = vpack.c.b16 %v635, %v634
        %v703 = vpack.c.b16 %v637, %v636
        %v704 = vpack.c.b16 %v639, %v638
        %v705 = vpack.c.b16 %v641, %v640
        %v706 = vpack.c.b16 %v643, %v642
        %v707 = vpack.c.b16 %v645, %v644
        %v708 = vpack.c.b16 %v647, %v646
        %v709 = vpack.c.b16 %v649, %v648
        %v710 = vpack.c.b16 %v651, %v650
        %v711 = vpack.c.b16 %v653, %v652
        %v712 = vpack.c.b16 %v655, %v654
        %v713 = vpack.c.b16 %v657, %v656
        %v714 = vpack.c.b16 %v659, %v658
        %v715 = vpack.c.b16 %v661, %v660
        %v716 = vpack.c.b16 %v663, %v662
        %v717 = vpack.c.b16 %v665, %v664
        %v718 = vpack.c.b16 %v667, %v666
        %v719 = vpack.c.b16 %v669, %v668
        %v720 = vpack.c.b16 %v671, %v670
        %v721 = vpack.c.b16 %v673, %v672
        %770 = vmatpush.bf16.msra.mxu0 %v681
        %771 = vmatpush.bf16.msra.mxu0 %v680
        %772 = vmatpush.bf16.msra.mxu0 %v679
        %773 = vmatpush.bf16.msra.mxu0 %v678
        %774 = vmatpush.bf16.msra.mxu0 %v677
        %775 = vmatpush.bf16.msra.mxu0 %v676
        %776 = vmatpush.bf16.msra.mxu0 %v675
        %777 = vmatpush.bf16.msra.mxu0 %v674
        %778 = vmatmul.bf16.gmra.mxu0 %v470
        %v779 = vpop.f32.mrf.mxu0
        %v780 = vadd.f32 %v460, %v779
        %v781 = vpop.f32.mrf.mxu0
        %782 = vdwg.mxu0
        %783 = vmatpush.bf16.msra.mxu0 %v689
        %784 = vmatpush.bf16.msra.mxu0 %v688
        %785 = vmatpush.bf16.msra.mxu0 %v687
        %786 = vmatpush.bf16.msra.mxu0 %v686
        %787 = vmatpush.bf16.msra.mxu0 %v685
        %788 = vmatpush.bf16.msra.mxu0 %v684
        %789 = vmatpush.bf16.msra.mxu0 %v683
        %790 = vmatpush.bf16.msra.mxu0 %v682
        %791 = vmatmul.bf16.gmra.mxu0 %v471
        %v792 = vpop.f32.mrf.mxu0
        %v793 = vadd.f32 %v780, %v792
        %v794 = vpop.f32.mrf.mxu0
        %795 = vdwg.mxu0
        %796 = vmatpush.bf16.msra.mxu0 %v697
        %797 = vmatpush.bf16.msra.mxu0 %v696
        %798 = vmatpush.bf16.msra.mxu0 %v695
        %799 = vmatpush.bf16.msra.mxu0 %v694
        %800 = vmatpush.bf16.msra.mxu0 %v693
        %801 = vmatpush.bf16.msra.mxu0 %v692
        %802 = vmatpush.bf16.msra.mxu0 %v691
        %803 = vmatpush.bf16.msra.mxu0 %v690
        %804 = vmatmul.bf16.gmra.mxu0 %v472
        %v805 = vpop.f32.mrf.mxu0
        %v806 = vadd.f32 %v793, %v805
        %v807 = vpop.f32.mrf.mxu0
        %808 = vdwg.mxu0
        %809 = vmatpush.bf16.msra.mxu0 %v705
        %810 = vmatpush.bf16.msra.mxu0 %v704
        %811 = vmatpush.bf16.msra.mxu0 %v703
        %812 = vmatpush.bf16.msra.mxu0 %v702
        %813 = vmatpush.bf16.msra.mxu0 %v701
        %814 = vmatpush.bf16.msra.mxu0 %v700
        %815 = vmatpush.bf16.msra.mxu0 %v699
        %816 = vmatpush.bf16.msra.mxu0 %v698
        %817 = vmatmul.bf16.gmra.mxu0 %v473
        %v818 = vpop.f32.mrf.mxu0
        %v819 = vadd.f32 %v806, %v818
        %v820 = vpop.f32.mrf.mxu0
        %821 = vdwg.mxu0
        %822 = vmatpush.bf16.msra.mxu0 %v713
        %823 = vmatpush.bf16.msra.mxu0 %v712
        %824 = vmatpush.bf16.msra.mxu0 %v711
        %825 = vmatpush.bf16.msra.mxu0 %v710
        %826 = vmatpush.bf16.msra.mxu0 %v709
        %827 = vmatpush.bf16.msra.mxu0 %v708
        %828 = vmatpush.bf16.msra.mxu0 %v707
        %829 = vmatpush.bf16.msra.mxu0 %v706
        %830 = vmatmul.bf16.gmra.mxu0 %v474
        %v831 = vpop.f32.mrf.mxu0
        %v832 = vadd.f32 %v819, %v831
        %v833 = vpop.f32.mrf.mxu0
        %834 = vdwg.mxu0
        %835 = vmatpush.bf16.msra.mxu0 %v721
        %836 = vmatpush.bf16.msra.mxu0 %v720
        %837 = vmatpush.bf16.msra.mxu0 %v719
        %838 = vmatpush.bf16.msra.mxu0 %v718
        %839 = vmatpush.bf16.msra.mxu0 %v717
        %840 = vmatpush.bf16.msra.mxu0 %v716
        %841 = vmatpush.bf16.msra.mxu0 %v715
        %842 = vmatpush.bf16.msra.mxu0 %v714
        %843 = vmatmul.bf16.gmra.mxu0 %v475
        %v844 = vpop.f32.mrf.mxu0
        %v845 = vadd.f32 %v832, %v844
        %v846 = vpop.f32.mrf.mxu0
        %847 = vdwg.mxu0
        %v848 = vmax.f32 %v845, 0.0
        %v849 = vld [vmem:[%s6] sm:$0xf]
        %v850 = vld [vmem:[%s6 + $0x4] sm:$0xf]
        %v851 = vpack.c.bf16 %v848, %v848
        %v852 = vld [vmem:[%s7] sm:$0xff]
        %v853 = vld [vmem:[%s7 + $0x8] sm:$0xff]
        %855 = vset.pattern.permute.xlu0 0
        %856 = vperm.xlu0 %855, %v852
        %v857 = vpop.permute.xlu0 %856
        %860 = vset.pattern.permute.xlu0 0
        %861 = vperm.xlu0 %860, %v853
        %v862 = vpop.permute.xlu0 %861
        %v866 = vunpack.c.l.b16 %v849
        %v867 = vunpack.c.l.b16 %v850
        %v868 = vpack.c.b16 %v867, %v866
        %vm869 = vcmask 64512
        %v871 = vsel %vm869, %v868, 0
        %vm873 = vcmask 1043456
        %v875 = vsel %vm873, %v851, 0
        %877 = vmatpush.bf16.msra.mxu0 0
        %878 = vmatpush.bf16.msra.mxu0 0
        %879 = vmatpush.bf16.msra.mxu0 0
        %880 = vmatpush.bf16.msra.mxu0 0
        %881 = vmatpush.bf16.msra.mxu0 0
        %882 = vmatpush.bf16.msra.mxu0 0
        %883 = vmatpush.bf16.msra.mxu0 0
        %884 = vmatpush.bf16.msra.mxu0 %v875
        %885 = vmatmul.bf16.gmra.mxu0 %v871
        %v886 = vpop.f32.mrf.mxu0
        %v887 = vadd.f32 %v857, %v886
        %v888 = vpop.f32.mrf.mxu0
        %v889 = vadd.f32 %v862, %v888
        %890 = vdwg.mxu0
        %v891 = vld [vmem:[%s4] sm:$0xf]
        %v892 = vld [vmem:[%s4 + $0x4] sm:$0xf]
        %v893 = vld [vmem:[%s355] sm:$0xf]
        %v894 = vld [vmem:[%s5] sm:$0xff]
        %v895 = vld [vmem:[%s5 + $0x8] sm:$0xff]
        %897 = vset.pattern.permute.xlu0 0
        %898 = vperm.xlu0 %897, %v894
        %v899 = vpop.permute.xlu0 %898
        %902 = vset.pattern.permute.xlu0 0
        %903 = vperm.xlu0 %902, %v895
        %v904 = vpop.permute.xlu0 %903
        %v908 = vunpack.c.l.b16 %v891
        %v909 = vunpack.c.l.b16 %v892
        %v910 = vpack.c.b16 %v909, %v908
        %v912 = vsel %vm869, %v910, 0
        %v915 = vsel %vm873, %v893, 0
        %917 = vmatpush.bf16.msra.mxu0 0
        %918 = vmatpush.bf16.msra.mxu0 0
        %919 = vmatpush.bf16.msra.mxu0 0
        %920 = vmatpush.bf16.msra.mxu0 0
        %921 = vmatpush.bf16.msra.mxu0 0
        %922 = vmatpush.bf16.msra.mxu0 0
        %923 = vmatpush.bf16.msra.mxu0 0
        %924 = vmatpush.bf16.msra.mxu0 %v915
        %925 = vmatmul.bf16.gmra.mxu0 %v912
        %v926 = vpop.f32.mrf.mxu0
        %v927 = vadd.f32 %v899, %v926
        %v928 = vpop.f32.mrf.mxu0
        %v929 = vadd.f32 %v904, %v928
        %930 = vdwg.mxu0
        %v931 = vadd.f32 %v887, %v927
        %v932 = vadd.f32 %v889, %v929
        %v933 = vmax.f32 %v931, 0.0
        %v934 = vmax.f32 %v932, 0.0
        %935 = vst [vmem:[%s351] sm:$0xff] %v933
        %936 = vst [vmem:[%s351 + $0x8] sm:$0xff] %v934
        %s937 = sand.u32 %s216, 1
        %s938 = scalar_lea.sflag [#allocation4], %s937
        %s939 = sand.u32 %s216, 1
        %s940 = smul.addr %s939, 16
        %s941 = scalar_lea.vmem [#allocation5], %s940
        // Predicated region
        $region57: #{_lambda_.1} parent=51 // pred_check
          %p942 = pneg %p226
        $region58: #{_lambda_.1} parent=51 // pred_check_branch
          %944 = sbr.rel (%p942) target = $region60
        $region59: #{_lambda_.1} parent=51 // pred_region
          %946 = vsyncadd %s938, 0
          %s947 = smul.addr %s25, 8
          %s948 = scalar_lea.hbm %s8, %s947
          %s949 = sshll.u32 %s941, 4
          %s950 = int_to_ptr.vmem [resolvable:$true] %s949
          %s951 = sshll.u32 %s948, 4
          %s952 = int_to_ptr.hbm [resolvable:$true] %s951
          %957 = dma.vmem_to_hbm [thread:$0]  %s950, 256, %s952, %s938, 128, 256, 8
        $region60: #{_lambda_.1} parent=51 // pred_fallthru
          _
      $region52: #{_lambda_.1} parent=5 // pred_fallthru
        _
      %p958 = scmp.le.s32.totalorder 2, %s20
      // Predicated region
      $region61: #{_lambda_.1} parent=5 // pred_check
        %p959 = pneg %p958
      $region62: #{_lambda_.1} parent=5 // pred_check_branch
        %961 = sbr.rel (%p959) target = $region64
      $region63: #{_lambda_.1} parent=5 // pred_region
        %s962 = ssub.s32 %s20, 2
        // Predicated region
        $region65: #{_lambda_.1} parent=63 // pred_check
          %p963 = pneg %p232
        $region66: #{_lambda_.1} parent=63 // pred_check_branch
          %965 = sbr.rel (%p963) target = $region68
        $region67: #{_lambda_.1} parent=63 // pred_region
          %s966 = sand.u32 %s217, 1
          %s967 = scalar_lea.sflag [#allocation4], %s966
          %s968 = sand.u32 %s217, 1
          %s969 = smul.addr %s968, 16
          %s970 = scalar_lea.vmem [#allocation5], %s969
          %972 = dma.done %s967, 256
        $region68: #{_lambda_.1} parent=63 // pred_fallthru
          _
      $region64: #{_lambda_.1} parent=5 // pred_fallthru
        _
    $region6: #{_lambda_.1} parent=1 // loop_footer
      %s24 = sadd.s32 1, %s20
    $region7: #{_lambda_.1} parent=1 // loop_footer_branch
      %19 = sbr.rel target = $region3
    $region8: #{_lambda_.1} parent=1 // loop_exit
      _
    %973 = vsyncpa [#allocation3], 1
    %s974 = scalar_lea.sflag [#allocation3], 1
    %975 = vsyncpa %s974, 1
    %976 = vsyncpa [#allocation4], 1
    %s977 = scalar_lea.sflag [#allocation4], 1
    %978 = vsyncpa %s977, 1

</llo_original>
